<compile_context>
chip_gen: v7x
topology: tpu7x:2x2x1
jax: 0.10.0
libtpu: 0.0.40
codegen_flags: <defaults>
</compile_context>

<pallas_src>
import jax
import jax.numpy as jnp
from jax.experimental import pallas as pl
from jax.experimental.pallas import tpu as pltpu


def _round_up(v, m):
    return ((v + m - 1) // m) * m


def class_block_kernel(x_ref, w1_ref, scale_ref, bias_ref, w2_ref, b2_ref,
                       out_ref, h_ref):
    # Grid = (batch tiles i, class tiles j).  The bottleneck activation only
    # depends on the batch tile, so compute it once per batch tile (j == 0)
    # into VMEM scratch and reuse it for every class tile.
    @pl.when(pl.program_id(1) == 0)
    def _():
        # Linear(input_dim, nb); its bias is folded into the BN affine below.
        h = jnp.dot(x_ref[...], w1_ref[...], preferred_element_type=jnp.float32)
        # BatchNorm1d (eval, running stats) + folded Linear1 bias: one FMA.
        h = h * scale_ref[...] + bias_ref[...]
        # ReLU.
        h = jnp.maximum(h, 0.0)
        # Dropout(p=0.3) is identity in eval mode.
        # TODO(synk): training-mode dropout mask / BN batch statistics not implemented.
        h_ref[...] = h.astype(h_ref.dtype)

    # Classifier Linear(nb, TN) on this class tile; f32 accumulation on MXU.
    out = jnp.dot(h_ref[...], w2_ref[...], preferred_element_type=jnp.float32)
    out_ref[...] = (out + b2_ref[...]).astype(out_ref.dtype)


def prepare_class_block_params(w1, b1, gamma, beta, running_mean, running_var,
                               w2, b2, *, eps=1e-5, tile_n=1024,
                               compute_dtype=jnp.bfloat16):
    """One-time weight preparation (do this at model-load time, not per call).

    Folds BN running stats + affine + the Linear1 bias into a single
    per-channel scale/bias, pads the class dim to a lane-dense multiple of the
    class tile TN (multiple of 128 -> unmasked vst stores), and casts matmul
    weights to compute_dtype (bf16 default; f32 accumulate happens in-kernel).
    """
    input_dim, nb = w1.shape
    class_num = w2.shape[1]

    tile_n = _round_up(tile_n, 128)
    TN = min(_round_up(class_num, 128), tile_n)
    Np = _round_up(class_num, TN)

    scale = (gamma / jnp.sqrt(running_var + eps)).astype(jnp.float32)
    bias_eff = ((b1 - running_mean) * scale + beta).astype(jnp.float32)

    w2p = jnp.pad(w2, ((0, 0), (0, Np - class_num)))
    b2p = jnp.pad(b2, (0, Np - class_num))

    return dict(
        w1=w1.astype(compute_dtype),
        scale=scale.reshape(1, nb),
        bias=bias_eff.reshape(1, nb),
        w2=w2p.astype(compute_dtype),
        b2=b2p.reshape(1, Np).astype(jnp.float32),
        class_num=class_num,
        tile_n=TN,
        compute_dtype=compute_dtype,
    )


def class_block_apply(x, params, *, tile_b=256, out_dtype=jnp.float32,
                      strip_class_padding=True):
    B, input_dim = x.shape
    nb = params["w1"].shape[1]
    Np = params["w2"].shape[1]
    TN = params["tile_n"]
    class_num = params["class_num"]
    compute_dtype = params["compute_dtype"]

    # ---- Batch tile: padding-aware, multiple of 16 (bf16 sublane packing),
    #      >= 2 grid steps when B allows so v7x's two TCs both get work. ----
    num_b_tiles = max(pl.cdiv(B, tile_b), 2)
    TB = _round_up(pl.cdiv(B, num_b_tiles), 16)
    TB = min(TB, _round_up(B, 16))
    Bp = _round_up(B, TB)

    xp = x if Bp == B else jnp.pad(x, ((0, Bp - B), (0, 0)))
    xp = xp.astype(compute_dtype)

    grid = (Bp // TB, Np // TN)

    # ---- VMEM accounting (double buffers on every pipelined operand). ----
    csz = jnp.dtype(compute_dtype).itemsize
    osz = jnp.dtype(out_dtype).itemsize
    vmem_bytes = (
        2 * TB * input_dim * csz      # x tile
        + 2 * input_dim * nb * csz    # W1 (constant index map)
        + 2 * nb * TN * csz           # W2 class tile
        + 2 * 2 * nb * 4              # BN scale + bias
        + 2 * TN * 4                  # b2 tile
        + 2 * TB * TN * osz           # out tile
        + TB * nb * csz               # h scratch
    )
    vmem_limit = min(max(2 * int(vmem_bytes), 16 * 1024 * 1024), 128 * 1024 * 1024)

    flops = 2 * Bp * input_dim * nb + 2 * Bp * nb * Np
    bytes_accessed = (Bp * input_dim * csz + input_dim * nb * csz
                      + (Bp // TB) * nb * Np * csz + Bp * Np * osz
                      + (2 * nb + Np) * 4)

    out_p = pl.pallas_call(
        class_block_kernel,
        out_shape=jax.ShapeDtypeStruct((Bp, Np), out_dtype),
        grid=grid,
        in_specs=[
            pl.BlockSpec((TB, input_dim), lambda i, j: (i, 0)),  # x tile (pipelined over B)
            pl.BlockSpec((input_dim, nb), lambda i, j: (0, 0)),  # W1 (fetched once, VMEM-resident)
            pl.BlockSpec((1, nb), lambda i, j: (0, 0)),          # BN scale
            pl.BlockSpec((1, nb), lambda i, j: (0, 0)),          # BN bias (+ folded b1)
            pl.BlockSpec((nb, TN), lambda i, j: (0, j)),         # W2 class tile (pipelined over N)
            pl.BlockSpec((1, TN), lambda i, j: (0, j)),          # b2 class tile
        ],
        out_specs=pl.BlockSpec((TB, TN), lambda i, j: (i, j)),
        scratch_shapes=[pltpu.VMEM((TB, nb), compute_dtype)],    # cached bottleneck acts
        compiler_params=pltpu.CompilerParams(
            dimension_semantics=("parallel", "arbitrary"),       # B sharded across TCs on v7x
            vmem_limit_bytes=vmem_limit),
        cost_estimate=pl.CostEstimate(
            flops=flops, transcendentals=0, bytes_accessed=bytes_accessed),
    )(xp, params["w1"], params["scale"], params["bias"],
      params["w2"], params["b2"])

    # Only copy when padding exists; callers can keep padded classes
    # (strip_class_padding=False) to avoid an extra HBM round trip.
    if strip_class_padding and (Bp != B or Np != class_num):
        return out_p[:B, :class_num]
    if Bp != B:
        return out_p[:B]
    return out_p


def class_block_forward(x, w1, b1, gamma, beta, running_mean, running_var,
                        w2, b2, eps=1e-5, **kwargs):
    """Convenience one-shot wrapper (prep + apply). Prefer calling
    prepare_class_block_params() once and class_block_apply() per batch."""
    params = prepare_class_block_params(w1, b1, gamma, beta, running_mean,
                                        running_var, w2, b2, eps=eps)
    return class_block_apply(x, params, **kwargs)


if __name__ == "__main__":
    # Small shapes consistent with the module's forward (2-D Linear inputs).
    B = 8
    input_dim = 64
    num_bottleneck = 128      # module default is 512; kept small for the demo
    class_num = 16

    key = jax.random.PRNGKey(0)
    k_x, k_w1, k_g, k_w2 = jax.random.split(key, 4)

    x = jax.random.normal(k_x, (B, input_dim), dtype=jnp.float32)

    # Linear 1: kaiming_normal_(fan_out) on PyTorch weight (nb, input_dim);
    # std = sqrt(2 / num_bottleneck). Stored transposed.
    w1 = (jax.random.normal(k_w1, (input_dim, num_bottleneck), dtype=jnp.float32)
          * jnp.sqrt(2.0 / num_bottleneck))
    b1 = jnp.zeros((num_bottleneck,), dtype=jnp.float32)

    # BatchNorm1d: weight ~ N(1.0, 0.02), bias = 0, running stats at init (0, 1).
    gamma = 1.0 + 0.02 * jax.random.normal(k_g, (num_bottleneck,), dtype=jnp.float32)
    beta = jnp.zeros((num_bottleneck,), dtype=jnp.float32)
    running_mean = jnp.zeros((num_bottleneck,), dtype=jnp.float32)
    running_var = jnp.ones((num_bottleneck,), dtype=jnp.float32)

    # Classifier Linear: weight ~ N(0, 0.001), bias = 0. Stored transposed.
    w2 = 0.001 * jax.random.normal(k_w2, (num_bottleneck, class_num), dtype=jnp.float32)
    b2 = jnp.zeros((class_num,), dtype=jnp.float32)

    # One-time weight prep (hoisted off the per-call path), then a jitted apply.
    params = prepare_class_block_params(w1, b1, gamma, beta, running_mean,
                                        running_var, w2, b2)
    apply_fn = jax.jit(lambda xx: class_block_apply(xx, params))

    out = jax.block_until_ready(apply_fn(x))
    assert out.shape == (B, class_num)

    # Pure-JAX reference with the same bf16-input / f32-accumulate math.
    eps = 1e-5
    scale_ref = gamma / jnp.sqrt(running_var + eps)
    bias_ref = (b1 - running_mean) * scale_ref + beta
    h_ref = jnp.dot(x.astype(jnp.bfloat16), w1.astype(jnp.bfloat16),
                    preferred_element_type=jnp.float32)
    h_ref = h_ref * scale_ref + bias_ref
    h_ref = jnp.maximum(h_ref, 0.0)
    out_ref = jnp.dot(h_ref.astype(jnp.bfloat16), w2.astype(jnp.bfloat16),
                      preferred_element_type=jnp.float32) + b2
    assert jnp.allclose(out, out_ref, atol=1e-3, rtol=1e-3), (
        float(jnp.max(jnp.abs(out - out_ref))))

    # Loose sanity check against the full-f32 eval-mode reference.
    h32 = jnp.maximum((x @ w1 + b1 - running_mean) / jnp.sqrt(running_var + eps)
                      * gamma + beta, 0.0)
    out32 = h32 @ w2 + b2
    assert jnp.allclose(out, out32, atol=5e-2, rtol=5e-2)

    print("KERNEL_OK")
</pallas_src>

<mosaic_0001>
module attributes {stable_mosaic.version = 11 : i64} {
  func.func @class_block_kernel(%arg0: i32, %arg1: i32, %arg2: memref<16x64xbf16, #tpu.memory_space<vmem>>, %arg3: memref<64x128xbf16, #tpu.memory_space<vmem>>, %arg4: memref<1x128xf32, #tpu.memory_space<vmem>>, %arg5: memref<1x128xf32, #tpu.memory_space<vmem>>, %arg6: memref<128x128xbf16, #tpu.memory_space<vmem>>, %arg7: memref<1x128xf32, #tpu.memory_space<vmem>>, %arg8: memref<16x128xf32, #tpu.memory_space<vmem>>, %arg9: memref<16x128xbf16, #tpu.memory_space<vmem>>) attributes {dimension_semantics = [#tpu.dimension_semantics<parallel>, #tpu.dimension_semantics<arbitrary>], iteration_bounds = array<i64: 1, 1>, scalar_prefetch = 0 : i64, scratch_operands = 1 : i64, tpu.core_type = #tpu.core_type<tc>, window_params = [{transform_indices = @transform_0, window_bounds = array<i64: 16, 64>}, {pipeline_mode = #tpu.pipeline_mode<synchronous>, transform_indices = @transform_1, window_bounds = array<i64: 64, 128>}, {pipeline_mode = #tpu.pipeline_mode<synchronous>, transform_indices = @transform_2, window_bounds = array<i64: 1, 128>}, {pipeline_mode = #tpu.pipeline_mode<synchronous>, transform_indices = @transform_3, window_bounds = array<i64: 1, 128>}, {transform_indices = @transform_4, window_bounds = array<i64: 128, 128>}, {transform_indices = @transform_5, window_bounds = array<i64: 1, 128>}, {transform_indices = @transform_6, window_bounds = array<i64: 16, 128>}]} {
    %c0_i32 = arith.constant 0 : i32
    %0 = arith.cmpi eq, %arg1, %c0_i32 : i32
    %1 = arith.extui %0 : i1 to i32
    %c0_i32_0 = arith.constant 0 : i32
    %2 = arith.cmpi ne, %1, %c0_i32_0 : i32
    scf.if %2 {
      %c0_8 = arith.constant 0 : index
      %c0_9 = arith.constant 0 : index
      %10 = vector.load %arg2[%c0_8, %c0_9] : memref<16x64xbf16, #tpu.memory_space<vmem>>, vector<16x64xbf16>
      %c0_10 = arith.constant 0 : index
      %c0_11 = arith.constant 0 : index
      %11 = vector.load %arg3[%c0_10, %c0_11] : memref<64x128xbf16, #tpu.memory_space<vmem>>, vector<64x128xbf16>
      %cst_12 = arith.constant dense<0.000000e+00> : vector<16x128xf32>
      %12 = tpu.matmul %10, %11, %cst_12 {dimension_numbers = #tpu.dot_dimension_numbers<[1], [0], [0], [1], [0, 0, 1, 1], [], []>} : vector<16x64xbf16>, vector<64x128xbf16>, vector<16x128xf32> -> vector<16x128xf32>
      %c0_13 = arith.constant 0 : index
      %c0_14 = arith.constant 0 : index
      %13 = vector.load %arg4[%c0_13, %c0_14] : memref<1x128xf32, #tpu.memory_space<vmem>>, vector<1x128xf32>
      %14 = vector.broadcast %13 : vector<1x128xf32> to vector<16x128xf32>
      %15 = arith.mulf %12, %14 : vector<16x128xf32>
      %c0_15 = arith.constant 0 : index
      %c0_16 = arith.constant 0 : index
      %16 = vector.load %arg5[%c0_15, %c0_16] : memref<1x128xf32, #tpu.memory_space<vmem>>, vector<1x128xf32>
      %17 = vector.broadcast %16 : vector<1x128xf32> to vector<16x128xf32>
      %18 = arith.addf %15, %17 : vector<16x128xf32>
      %cst_17 = arith.constant 0.000000e+00 : f32
      %19 = vector.broadcast %cst_17 : f32 to vector<16x128xf32>
      %20 = arith.maximumf %18, %19 : vector<16x128xf32>
      %21 = arith.truncf %20 : vector<16x128xf32> to vector<16x128xbf16>
      %c0_18 = arith.constant 0 : index
      %c0_19 = arith.constant 0 : index
      %22 = vector.load %arg9[%c0_18, %c0_19] : memref<16x128xbf16, #tpu.memory_space<vmem>>, vector<16x128xbf16>
      tpu.vector_store %arg9[%c0_18, %c0_19], %21 {strides = array<i32>} : memref<16x128xbf16, #tpu.memory_space<vmem>>, vector<16x128xbf16>,
    } else {
    }
    %c0 = arith.constant 0 : index
    %c0_1 = arith.constant 0 : index
    %3 = vector.load %arg9[%c0, %c0_1] : memref<16x128xbf16, #tpu.memory_space<vmem>>, vector<16x128xbf16>
    %c0_2 = arith.constant 0 : index
    %c0_3 = arith.constant 0 : index
    %4 = vector.load %arg6[%c0_2, %c0_3] : memref<128x128xbf16, #tpu.memory_space<vmem>>, vector<128x128xbf16>
    %cst = arith.constant dense<0.000000e+00> : vector<16x128xf32>
    %5 = tpu.matmul %3, %4, %cst {dimension_numbers = #tpu.dot_dimension_numbers<[1], [0], [0], [1], [0, 0, 1, 1], [], []>} : vector<16x128xbf16>, vector<128x128xbf16>, vector<16x128xf32> -> vector<16x128xf32>
    %c0_4 = arith.constant 0 : index
    %c0_5 = arith.constant 0 : index
    %6 = vector.load %arg7[%c0_4, %c0_5] : memref<1x128xf32, #tpu.memory_space<vmem>>, vector<1x128xf32>
    %7 = vector.broadcast %6 : vector<1x128xf32> to vector<16x128xf32>
    %8 = arith.addf %5, %7 : vector<16x128xf32>
    %c0_6 = arith.constant 0 : index
    %c0_7 = arith.constant 0 : index
    %9 = vector.load %arg8[%c0_6, %c0_7] : memref<16x128xf32, #tpu.memory_space<vmem>>, vector<16x128xf32>
    tpu.vector_store %arg8[%c0_6, %c0_7], %8 {strides = array<i32>} : memref<16x128xf32, #tpu.memory_space<vmem>>, vector<16x128xf32>,
    return
  }
  func.func @transform_0(%arg0: i32, %arg1: i32) -> (i32, i32) {
    %c0_i32 = arith.constant 0 : i32
    %c0_i32_0 = arith.constant 0 : i32
    return %arg0, %c0_i32 : i32, i32
  }
  func.func @transform_1(%arg0: i32, %arg1: i32) -> (i32, i32) {
    %c0_i32 = arith.constant 0 : i32
    %c0_i32_0 = arith.constant 0 : i32
    %c0_i32_1 = arith.constant 0 : i32
    return %c0_i32, %c0_i32_0 : i32, i32
  }
  func.func @transform_2(%arg0: i32, %arg1: i32) -> (i32, i32) {
    %c0_i32 = arith.constant 0 : i32
    %c0_i32_0 = arith.constant 0 : i32
    %c0_i32_1 = arith.constant 0 : i32
    return %c0_i32, %c0_i32_0 : i32, i32
  }
  func.func @transform_3(%arg0: i32, %arg1: i32) -> (i32, i32) {
    %c0_i32 = arith.constant 0 : i32
    %c0_i32_0 = arith.constant 0 : i32
    %c0_i32_1 = arith.constant 0 : i32
    return %c0_i32, %c0_i32_0 : i32, i32
  }
  func.func @transform_4(%arg0: i32, %arg1: i32) -> (i32, i32) {
    %c0_i32 = arith.constant 0 : i32
    %c0_i32_0 = arith.constant 0 : i32
    return %c0_i32, %arg1 : i32, i32
  }
  func.func @transform_5(%arg0: i32, %arg1: i32) -> (i32, i32) {
    %c0_i32 = arith.constant 0 : i32
    %c0_i32_0 = arith.constant 0 : i32
    return %c0_i32, %arg1 : i32, i32
  }
  func.func @transform_6(%arg0: i32, %arg1: i32) -> (i32, i32) {
    %c0_i32 = arith.constant 0 : i32
    return %arg0, %arg1 : i32, i32
  }
}

</mosaic_0001>

<llo_original>
// kernel: _lambda_.1
$region0: #{_lambda_.1}
  #allocation0 [shape = 'u32[]', space=smem, size = 0x4, offset = 0x4, fixed_abs, tag = 'smem constant byte address 0x4 - core index']
  #allocation1 [shape = 'u32[144,128]{1,0:T(1,128)}', space=vmem, size = 0x12000, scoped, tag = 'internal scratch']
  #allocation2 [shape = 'bf16[16,128]{1,0:T(16,128)(2,1)}', space=vmem, size = 0x1000, scoped, tag = 'scratch operand']
  %s0 = inlined_call_operand.vmem [shape: bf16[16,64], index: 0, kind: input, shape index: {}]
  %s1 = inlined_call_operand.vmem [shape: bf16[64,128], index: 1, kind: input, shape index: {}]
  %s2 = inlined_call_operand.vmem [shape: f32[1,128], index: 2, kind: input, shape index: {}]
  %s3 = inlined_call_operand.vmem [shape: f32[1,128], index: 3, kind: input, shape index: {}, may-alias: {3,5}]
  %s4 = inlined_call_operand.hbm [shape: bf16[128,128], index: 4, kind: input, shape index: {}]
  %s5 = inlined_call_operand.vmem [shape: f32[1,128], index: 5, kind: input, shape index: {}, may-alias: {3,5}]
  %s6 = inlined_call_operand.vmem [shape: f32[16,128], index: 6, kind: output, shape index: {}]
  %s7 = sld [smem:[#allocation0]]
  $region42: #{_lambda_.1} parent=0
    _
  %s9 = ssub.s32 1, %s7
  %s10 = scalar_select 0, %s9, %s7
  $region1: #{_lambda_.1} parent=0
    #allocation3 [shape = 'u8[32768]{0}', space=vmem, size = 0x8000, scoped, tag = 'input window, operand 4, single buffered']
    #allocation4 [shape = 's32[1]{0}', space=sflag, size = 0x4, scoped, tag = 'scoped memory for _lambda_.1']
    %11 = vsyncpa [#allocation4], 0
    // Predicated region
    $region2: #{_lambda_.1} parent=1 // pred_check
      _
    $region3: #{_lambda_.1} parent=1 // pred_check_branch
      %13 = sbr.rel (0) target = $region5
    $region4: #{_lambda_.1} parent=1 // pred_region
      _
    $region5: #{_lambda_.1} parent=1 // pred_fallthru
      _
    // Predicated region
    $region6: #{_lambda_.1} parent=1 // pred_check
      _
    $region7: #{_lambda_.1} parent=1 // pred_check_branch
      %15 = sbr.rel (0) target = $region9
    $region8: #{_lambda_.1} parent=1 // pred_region
      _
    $region9: #{_lambda_.1} parent=1 // pred_fallthru
      _
    // Predicated region
    $region10: #{_lambda_.1} parent=1 // pred_check
      _
    $region11: #{_lambda_.1} parent=1 // pred_check_branch
      %17 = sbr.rel (0) target = $region13
    $region12: #{_lambda_.1} parent=1 // pred_region
      _
    $region13: #{_lambda_.1} parent=1 // pred_fallthru
      _
    // Predicated region
    $region14: #{_lambda_.1} parent=1 // pred_check
      _
    $region15: #{_lambda_.1} parent=1 // pred_check_branch
      %19 = sbr.rel (0) target = $region17
    $region16: #{_lambda_.1} parent=1 // pred_region
      _
    $region17: #{_lambda_.1} parent=1 // pred_fallthru
      _
    // Predicated region
    $region18: #{_lambda_.1} parent=1 // pred_check
      _
    $region19: #{_lambda_.1} parent=1 // pred_check_branch
      %21 = sbr.rel (0) target = $region21
    $region20: #{_lambda_.1} parent=1 // pred_region
      %s23 = ssub.s32 1024, 1024
      %24 = vsyncadd [#allocation4], %s23
      %s25 = sshll.u32 [#allocation3], 4
      %s26 = int_to_ptr.vmem [resolvable:$true] %s25
      %31 = dma.hbm_to_vmem [thread:$0]  %s4, 1024, %s26, [#allocation4], 64, 64, 4
    $region21: #{_lambda_.1} parent=1 // pred_fallthru
      _
    // Predicated region
    $region22: #{_lambda_.1} parent=1 // pred_check
      _
    $region23: #{_lambda_.1} parent=1 // pred_check_branch
      %33 = sbr.rel (0) target = $region25
    $region24: #{_lambda_.1} parent=1 // pred_region
      _
    $region25: #{_lambda_.1} parent=1 // pred_fallthru
      _
    // Predicated region
    $region26: #{_lambda_.1} parent=1 // pred_check
      _
    $region27: #{_lambda_.1} parent=1 // pred_check_branch
      %35 = sbr.rel (0) target = $region29
    $region28: #{_lambda_.1} parent=1 // pred_region
      %36 = dma.done [#allocation4], 1024
    $region29: #{_lambda_.1} parent=1 // pred_fallthru
      _
    %p38 = scmp.eq.s32.totalorder 0, 0
    // Predicated region
    $region30: #{_lambda_.1} parent=1 // pred_check
      %p39 = pneg %p38
    $region31: #{_lambda_.1} parent=1 // pred_check_branch
      %41 = sbr.rel (%p39) target = $region33
    $region32: #{_lambda_.1} parent=1 // pred_region
      %v42 = vld [vmem:[%s0] sm:$0xf]
      %v43 = vld [vmem:[%s0 + $0x4] sm:$0xf]
      %v44 = vld [vmem:[%s1] sm:$0xf]
      %v45 = vld [vmem:[%s1 + $0x4] sm:$0xf]
      %v46 = vld [vmem:[%s1 + $0x8] sm:$0xf]
      %v47 = vld [vmem:[%s1 + $0xc] sm:$0xf]
      %v48 = vld [vmem:[%s1 + $0x10] sm:$0xf]
      %v49 = vld [vmem:[%s1 + $0x14] sm:$0xf]
      %v50 = vld [vmem:[%s1 + $0x18] sm:$0xf]
      %v51 = vld [vmem:[%s1 + $0x1c] sm:$0xf]
      %v54 = vunpack.c.l.b16 %v42
      %v55 = vunpack.c.l.b16 %v43
      %v56 = vpack.c.b16 %v55, %v54
      %v65 = vunpack.c.l.b16 %v44
      %v66 = vunpack.c.l.b16 %v45
      %v67 = vunpack.c.l.b16 %v46
      %v68 = vunpack.c.l.b16 %v47
      %v69 = vunpack.c.l.b16 %v48
      %v70 = vunpack.c.l.b16 %v49
      %v71 = vunpack.c.l.b16 %v50
      %v72 = vunpack.c.l.b16 %v51
      %v73 = vpack.c.b16 %v66, %v65
      %v74 = vpack.c.b16 %v68, %v67
      %v75 = vpack.c.b16 %v70, %v69
      %v76 = vpack.c.b16 %v72, %v71
      %vm81 = vcmask 523264
      %v83 = vsel %vm81, %v56, 0
      %85 = vmatprep.subr.bf16.mxu0 0
      %86 = vmatpush1.bf16.msra.mxu0 %v73
      %87 = vmatprep.subr.bf16.mxu0 0
      %88 = vmatpush1.bf16.msra.mxu0 %v74
      %89 = vmatprep.subr.bf16.mxu0 0
      %90 = vmatpush1.bf16.msra.mxu0 %v75
      %91 = vmatprep.subr.bf16.mxu0 0
      %92 = vmatpush1.bf16.msra.mxu0 %v76
      %93 = vmatprep.subr.bf16.mxu0 0
      %94 = vmatpush1.bf16.msra.mxu0 0
      %95 = vmatprep.subr.bf16.mxu0 0
      %96 = vmatpush1.bf16.msra.mxu0 0
      %97 = vmatprep.subr.bf16.mxu0 0
      %98 = vmatpush1.bf16.msra.mxu0 0
      %99 = vmatprep.subr.bf16.mxu0 0
      %100 = vmatpush1.bf16.msra.mxu0 0
      %101 = vmatprep.subr.bf16.mxu0 0
      %102 = vmatpush1.bf16.msra.mxu0 0
      %103 = vmatprep.subr.bf16.mxu0 0
      %104 = vmatpush1.bf16.msra.mxu0 0
      %105 = vmatprep.subr.bf16.mxu0 0
      %106 = vmatpush1.bf16.msra.mxu0 0
      %107 = vmatprep.subr.bf16.mxu0 0
      %108 = vmatpush1.bf16.msra.mxu0 0
      %109 = vmatprep.subr.bf16.mxu0 0
      %110 = vmatpush1.bf16.msra.mxu0 0
      %111 = vmatprep.subr.bf16.mxu0 0
      %112 = vmatpush1.bf16.msra.mxu0 0
      %113 = vmatprep.subr.bf16.mxu0 0
      %114 = vmatpush1.bf16.msra.mxu0 0
      %115 = vmatprep.subr.bf16.mxu0 0
      %116 = vmatpush1.bf16.msra.mxu0 0
      %117 = vmatprep.mubr.bf16.mxu0 0
      %118 = vmatmul.mubr.bf16.gmra.mrb[0].mxu0 %v83
      %v119 = vpop.f32.mrb[0].mxu0
      %v120 = vadd.f32 0.0, %v119
      %v121 = vpop.f32.mrb[0].mxu0
      %v122 = vpop.f32.mrb[0].mxu0
      %v123 = vadd.f32 0.0, %v122
      %v124 = vpop.f32.mrb[0].mxu0
      %125 = vdwg.mxu0
      %v126 = vld [vmem:[%s2] sm:$0x1]
      %v128 = vlaneseq
      %v129 = vshrl.u32 %v128, 7
      %v130 = vsub.s32 0, %v129
      %v131 = vrot.slane %v126, %v130
      %v133 = vmul.f32 %v120, %v131
      %v134 = vmul.f32 %v123, %v131
      %v135 = vld [vmem:[%s3] sm:$0x1]
      %v137 = vlaneseq
      %v138 = vshrl.u32 %v137, 7
      %v139 = vsub.s32 0, %v138
      %v140 = vrot.slane %v135, %v139
      %v142 = vadd.f32 %v133, %v140
      %v143 = vadd.f32 %v134, %v140
      %v144 = vmax.f32 %v142, 0.0
      %v145 = vmax.f32 %v143, 0.0
      %v146 = vpack.c.bf16 %v145, %v144
      %147 = vst [vmem:[#allocation2] sm:$0xff] %v146
    $region33: #{_lambda_.1} parent=1 // pred_fallthru
      _
    %v148 = vld [vmem:[#allocation2] sm:$0xff]
    %v149 = vld [vmem:[#allocation3] sm:$0xf]
    %v150 = vld [vmem:[#allocation3 + $0x4] sm:$0xf]
    %v151 = vld [vmem:[#allocation3 + $0x8] sm:$0xf]
    %v152 = vld [vmem:[#allocation3 + $0xc] sm:$0xf]
    %v153 = vld [vmem:[#allocation3 + $0x10] sm:$0xf]
    %v154 = vld [vmem:[#allocation3 + $0x14] sm:$0xf]
    %v155 = vld [vmem:[#allocation3 + $0x18] sm:$0xf]
    %v156 = vld [vmem:[#allocation3 + $0x1c] sm:$0xf]
    %v157 = vld [vmem:[#allocation3 + $0x20] sm:$0xf]
    %v158 = vld [vmem:[#allocation3 + $0x24] sm:$0xf]
    %v159 = vld [vmem:[#allocation3 + $0x28] sm:$0xf]
    %v160 = vld [vmem:[#allocation3 + $0x2c] sm:$0xf]
    %v161 = vld [vmem:[#allocation3 + $0x30] sm:$0xf]
    %v162 = vld [vmem:[#allocation3 + $0x34] sm:$0xf]
    %v163 = vld [vmem:[#allocation3 + $0x38] sm:$0xf]
    %v164 = vld [vmem:[#allocation3 + $0x3c] sm:$0xf]
    %v165 = vld [vmem:[%s5] sm:$0x1]
    %v167 = vlaneseq
    %v168 = vshrl.u32 %v167, 7
    %v169 = vsub.s32 0, %v168
    %v170 = vrot.slane %v165, %v169
    %v188 = vunpack.c.l.b16 %v149
    %v189 = vunpack.c.l.b16 %v150
    %v190 = vunpack.c.l.b16 %v151
    %v191 = vunpack.c.l.b16 %v152
    %v192 = vunpack.c.l.b16 %v153
    %v193 = vunpack.c.l.b16 %v154
    %v194 = vunpack.c.l.b16 %v155
    %v195 = vunpack.c.l.b16 %v156
    %v196 = vunpack.c.l.b16 %v157
    %v197 = vunpack.c.l.b16 %v158
    %v198 = vunpack.c.l.b16 %v159
    %v199 = vunpack.c.l.b16 %v160
    %v200 = vunpack.c.l.b16 %v161
    %v201 = vunpack.c.l.b16 %v162
    %v202 = vunpack.c.l.b16 %v163
    %v203 = vunpack.c.l.b16 %v164
    %v204 = vpack.c.b16 %v189, %v188
    %v205 = vpack.c.b16 %v191, %v190
    %v206 = vpack.c.b16 %v193, %v192
    %v207 = vpack.c.b16 %v195, %v194
    %v208 = vpack.c.b16 %v197, %v196
    %v209 = vpack.c.b16 %v199, %v198
    %v210 = vpack.c.b16 %v201, %v200
    %v211 = vpack.c.b16 %v203, %v202
    %220 = vmatprep.subr.bf16.mxu0 0
    %221 = vmatpush1.bf16.msra.mxu0 %v204
    %222 = vmatprep.subr.bf16.mxu0 0
    %223 = vmatpush1.bf16.msra.mxu0 %v205
    %224 = vmatprep.subr.bf16.mxu0 0
    %225 = vmatpush1.bf16.msra.mxu0 %v206
    %226 = vmatprep.subr.bf16.mxu0 0
    %227 = vmatpush1.bf16.msra.mxu0 %v207
    %228 = vmatprep.subr.bf16.mxu0 0
    %229 = vmatpush1.bf16.msra.mxu0 %v208
    %230 = vmatprep.subr.bf16.mxu0 0
    %231 = vmatpush1.bf16.msra.mxu0 %v209
    %232 = vmatprep.subr.bf16.mxu0 0
    %233 = vmatpush1.bf16.msra.mxu0 %v210
    %234 = vmatprep.subr.bf16.mxu0 0
    %235 = vmatpush1.bf16.msra.mxu0 %v211
    %236 = vmatprep.subr.bf16.mxu0 0
    %237 = vmatpush1.bf16.msra.mxu0 0
    %238 = vmatprep.subr.bf16.mxu0 0
    %239 = vmatpush1.bf16.msra.mxu0 0
    %240 = vmatprep.subr.bf16.mxu0 0
    %241 = vmatpush1.bf16.msra.mxu0 0
    %242 = vmatprep.subr.bf16.mxu0 0
    %243 = vmatpush1.bf16.msra.mxu0 0
    %244 = vmatprep.subr.bf16.mxu0 0
    %245 = vmatpush1.bf16.msra.mxu0 0
    %246 = vmatprep.subr.bf16.mxu0 0
    %247 = vmatpush1.bf16.msra.mxu0 0
    %248 = vmatprep.subr.bf16.mxu0 0
    %249 = vmatpush1.bf16.msra.mxu0 0
    %250 = vmatprep.subr.bf16.mxu0 0
    %251 = vmatpush1.bf16.msra.mxu0 0
    %252 = vmatprep.mubr.bf16.mxu0 0
    %253 = vmatmul.mubr.bf16.gmra.mrb[0].mxu0 %v148
    %v254 = vpop.f32.mrb[0].mxu0
    %v255 = vadd.f32 %v170, %v254
    %v256 = vpop.f32.mrb[0].mxu0
    %v257 = vpop.f32.mrb[0].mxu0
    %v258 = vadd.f32 %v170, %v257
    %v259 = vpop.f32.mrb[0].mxu0
    %260 = vdwg.mxu0
    %261 = vst [vmem:[%s6] sm:$0xff] %v255
    %262 = vst [vmem:[%s6 + $0x8] sm:$0xff] %v258
    // Predicated region
    $region34: #{_lambda_.1} parent=1 // pred_check
      _
    $region35: #{_lambda_.1} parent=1 // pred_check_branch
      %264 = sbr.rel (0) target = $region37
    $region36: #{_lambda_.1} parent=1 // pred_region
      _
    $region37: #{_lambda_.1} parent=1 // pred_fallthru
      _
    // Predicated region
    $region38: #{_lambda_.1} parent=1 // pred_check
      _
    $region39: #{_lambda_.1} parent=1 // pred_check_branch
      %266 = sbr.rel (0) target = $region41
    $region40: #{_lambda_.1} parent=1 // pred_region
      _
    $region41: #{_lambda_.1} parent=1 // pred_fallthru
      _
    %267 = vsyncpa [#allocation4], 1

</llo_original>
